<compile_context>
chip_gen: v5e
topology: v5e:2x2
jax: 0.10.0
libtpu: 0.0.40
codegen_flags: <defaults>
</compile_context>

<pallas_src>
import jax
import jax.numpy as jnp
from jax.experimental import pallas as pl
from jax.experimental.pallas import tpu as pltpu


def _round_up(x, m):
    return ((x + m - 1) // m) * m


def butd_kernel(v_ref, q_ref,
                wv_ref, bv_ref,        # v_proj
                wqc_ref, bqc_ref,      # fused [q_proj | q_net] weights: (QD, 2H)
                wl_ref, bl_ref,        # linear (num_hid -> 1): wl as (1, H), bl scalar in SMEM
                wvn_ref, bvn_ref,      # v_net
                joint_ref, att_ref):
    TB, K, VD = v_ref.shape
    H = wv_ref.shape[1]

    # K chunk == sublane pack of the MXU operand dtype, so merging (TB, KC, VD)
    # into (TB*KC, VD) for the MXU is layout-free (bf16 packs 16 rows, f32 packs 8).
    pack = 16 if jnp.dtype(v_ref.dtype).itemsize == 2 else 8
    KC = K if K <= pack else pack

    bl = bl_ref[0, 0]                       # scalar bias from SMEM
    bv = bv_ref[...]                        # (1, H) f32
    wv = wv_ref[...]                        # (VD, H) mxu dtype

    # ---- fused q-side projection: [q_proj | q_repr] in a single MXU matmul --
    qcat = jnp.maximum(
        jnp.dot(q_ref[...], wqc_ref[...],
                preferred_element_type=jnp.float32) + bqc_ref[...],
        0.0)                                # (TB, 2H) f32
    q_proj = qcat[:, :H]
    q_repr = qcat[:, H:]

    # Fold wl into q_proj (joint_repr is never materialized):
    # relu(sum_h relu(v@Wv+bv)*q_proj*wl + bl) == relu(sum_h relu(v@Wv+bv)*(q_proj*wl) + bl)
    q_scaled = (q_proj * wl_ref[...])[:, None, :]   # (TB, 1, H) f32, hoisted out of the loop

    # ---- logits over K, chunked so relu(v@Wv+bv) lives only (TB, KC, H) at a time
    chunks = []
    for kc in range(0, K, KC):
        ck = min(KC, K - kc)
        v_chunk = v_ref[:, kc:kc + ck, :]                       # (TB, ck, VD)
        vp = jnp.dot(v_chunk.reshape(TB * ck, VD), wv,
                     preferred_element_type=jnp.float32)        # (TB*ck, H) f32 acc
        vp = jnp.maximum(vp + bv, 0.0).reshape(TB, ck, H)
        chunks.append(jnp.maximum(
            jnp.sum(vp * q_scaled, axis=-1) + bl, 0.0))         # (TB, ck)
    logits = chunks[0] if len(chunks) == 1 else jnp.concatenate(chunks, axis=1)
    # Dropout = identity (eval mode).

    # ---- softmax over K (lane axis); approx reciprocal runs on the EUP slot --
    # NOTE: padded rows of a ragged last batch tile may compute garbage here;
    # rows are independent and out-of-bounds stores are masked, so valid rows are safe.
    m = jnp.max(logits, axis=1, keepdims=True)
    e = jnp.exp(logits - m)
    att = e * pl.reciprocal(jnp.sum(e, axis=1, keepdims=True), approx=True)
    att_ref[...] = att                      # (TB, K) lane-dense store

    # ---- attended visual feature, chunked over K to bound the f32 product ---
    # K is small (8..36): VPU/XLU reduce.  If K ever grows to >=128, switch to an
    # MXU contraction instead.
    v_emb = jnp.zeros((TB, VD), jnp.float32)
    for kc in range(0, K, KC):
        ck = min(KC, K - kc)
        v_emb = v_emb + jnp.sum(
            att[:, kc:kc + ck, None] * v_ref[:, kc:kc + ck, :], axis=1)   # f32

    v_repr = jnp.maximum(
        jnp.dot(v_emb.astype(wvn_ref.dtype), wvn_ref[...],
                preferred_element_type=jnp.float32) + bvn_ref[...],
        0.0)                                # (TB, H) f32
    joint_ref[...] = q_repr * v_repr        # (TB, H)


def prepare_params(params, mxu_dtype=jnp.bfloat16):
    """One-time parameter prep (hoisted out of the per-forward path).

    Fuses the q_proj / q_net weights into a single (QD, 2H) operand and casts the
    MXU operands to `mxu_dtype` (biases / wl stay f32; accumulation is f32)."""
    f32 = jnp.float32
    return {
        "wv": params["wv"].astype(mxu_dtype),
        "bv": params["bv"].reshape(1, -1).astype(f32),
        "w_qcat": jnp.concatenate([params["wq"], params["wqn"]], axis=1).astype(mxu_dtype),
        "b_qcat": jnp.concatenate([params["bq"].reshape(1, -1),
                                   params["bqn"].reshape(1, -1)], axis=1).astype(f32),
        "wl": params["wl"].reshape(1, -1).astype(f32),
        "bl": params["bl"].reshape(1, 1).astype(f32),
        "wvn": params["wvn"].astype(mxu_dtype),
        "bvn": params["bvn"].reshape(1, -1).astype(f32),
    }


def butd_forward(v_relation, q_emb, prep, *, batch_tile=None):
    B, K, VD = v_relation.shape
    QD = q_emb.shape[1]
    H = prep["wv"].shape[1]
    mxu_dtype = prep["wv"].dtype
    itemsize = jnp.dtype(mxu_dtype).itemsize
    f32b = 4

    v = v_relation.astype(mxu_dtype)
    q = q_emb.astype(mxu_dtype)

    # ---- per-generation VMEM budget -> batch tile ---------------------------
    try:
        vmem_cap = int(pltpu.get_tpu_info().vmem_capacity_bytes)
    except Exception:
        vmem_cap = 64 * 1024 * 1024                    # conservative (v7x floor)
    # Leave headroom for compiler internal scratch; cap at ~112 MiB on 128 MiB parts.
    vmem_limit = int(max(min(vmem_cap - (8 << 20), 112 << 20), 32 << 20))

    pack = 16 if itemsize == 2 else 8
    KC = min(K, pack)
    # Weights: single VMEM copy (non-blocked specs below => no double buffering).
    weight_bytes = (2 * VD * H + QD * 2 * H) * itemsize + (5 * H + 1 + K) * f32b
    # Per batch-row: double-buffered activation tiles + double-buffered outputs
    # + largest transient f32 intermediates in the kernel body (conservative).
    per_row = (2 * (K * VD + QD) * itemsize
               + 2 * (H + K) * f32b
               + (KC * H + KC * VD + 6 * H + VD + 4 * K) * f32b)
    budget = int(0.85 * vmem_limit) - weight_bytes
    tb_cap = max(8, (budget // per_row) // 8 * 8) if budget > per_row * 8 else 8

    if batch_tile is not None:
        TB = batch_tile
    elif B <= 8:
        TB = B                      # too small to split into sublane-aligned tiles
    else:
        # Aim for >= 2 grid steps so v7x's two TensorCores both get batch tiles,
        # stay sublane-aligned and inside the VMEM budget.
        TB = min(_round_up(pl.cdiv(B, 2), 8), tb_cap, 512)
    grid = (pl.cdiv(B, TB),)

    vmem = pltpu.MemorySpace.VMEM
    smem = pltpu.MemorySpace.SMEM
    # Full-array (non-blocked) specs: placed in VMEM/SMEM once for the whole
    # kernel, outside the revolving pipeline => single-buffered, never re-DMA'd.
    wfull = pl.BlockSpec(memory_space=vmem)

    in_specs = [
        pl.BlockSpec((TB, K, VD), lambda i: (i, 0, 0)),      # v tile (pipelined)
        pl.BlockSpec((TB, QD), lambda i: (i, 0)),            # q tile (pipelined)
        wfull, wfull,                                        # wv, bv
        wfull, wfull,                                        # w_qcat, b_qcat
        wfull,                                               # wl
        pl.BlockSpec(memory_space=smem),                     # bl (scalar)
        wfull, wfull,                                        # wvn, bvn
    ]
    out_specs = (
        pl.BlockSpec((TB, H), lambda i: (i, 0)),             # joint_emb
        pl.BlockSpec((TB, K), lambda i: (i, 0)),             # att (lane-dense)
    )

    cost = pl.CostEstimate(
        flops=2 * B * K * VD * H + 2 * B * QD * (2 * H) + 2 * B * VD * H,
        transcendentals=B * K,
        bytes_accessed=((B * K * VD + B * QD) * itemsize
                        + (2 * VD * H + QD * 2 * H) * itemsize
                        + (5 * H + 1) * f32b
                        + (B * H + B * K) * f32b))

    joint, att = pl.pallas_call(
        butd_kernel,
        grid=grid,
        in_specs=in_specs,
        out_specs=out_specs,
        out_shape=(jax.ShapeDtypeStruct((B, H), jnp.float32),
                   jax.ShapeDtypeStruct((B, K), jnp.float32)),
        compiler_params=pltpu.CompilerParams(
            dimension_semantics=("parallel",),     # v7x: shard batch tiles across 2 TCs
            vmem_limit_bytes=vmem_limit),
        cost_estimate=cost,
    )(v, q, prep["wv"], prep["bv"], prep["w_qcat"], prep["b_qcat"],
      prep["wl"], prep["bl"], prep["wvn"], prep["bvn"])

    # Trailing singleton is added here so the kernel store stays lane-dense.
    return joint, att[:, :, None]


def init_params(key, v_relation_dim, q_dim, num_hid):
    """Deterministic synthetic init (weight_norm(Linear)+ReLU == Linear+ReLU in fwd)."""
    ks = jax.random.split(key, 10)

    def lin(kw, kb, din, dout):
        w = jax.random.normal(kw, (din, dout), jnp.float32) / jnp.sqrt(jnp.float32(din))
        b = 0.01 * jax.random.normal(kb, (1, dout), jnp.float32)
        return w, b

    wv, bv = lin(ks[0], ks[1], v_relation_dim, num_hid)     # v_proj
    wq, bq = lin(ks[2], ks[3], q_dim, num_hid)              # q_proj
    wl_full, bl = lin(ks[4], ks[5], num_hid, 1)             # linear (num_hid -> 1)
    wqn, bqn = lin(ks[6], ks[7], q_dim, num_hid)            # q_net
    wvn, bvn = lin(ks[8], ks[9], v_relation_dim, num_hid)   # v_net
    return {
        "wv": wv, "bv": bv,
        "wq": wq, "bq": bq,
        "wl": wl_full.T,                                    # (1, H) row for lane-reduce
        "bl": bl.reshape(1, 1),
        "wqn": wqn, "bqn": bqn,
        "wvn": wvn, "bvn": bvn,
    }


def butd_reference(v, q, p, mxu_dtype=jnp.float32):
    """Pure-JAX reference matching the PyTorch forward (eval mode).

    `mxu_dtype` quantizes the MXU operands the same way the kernel does (f32 math
    otherwise), so the comparison isolates kernel-specific error sources."""
    cast = lambda x: x.astype(mxu_dtype).astype(jnp.float32)
    v_c, q_c = cast(v), cast(q)
    v_proj = jax.nn.relu(jnp.einsum("bkv,vh->bkh", v_c, cast(p["wv"])) + p["bv"][None])
    q_proj = jax.nn.relu(q_c @ cast(p["wq"]) + p["bq"])[:, None, :]
    joint = v_proj * q_proj
    logits = jax.nn.relu(jnp.sum(joint * p["wl"][None], axis=-1, keepdims=True)
                         + p["bl"][None])
    att = jax.nn.softmax(logits, axis=1)
    v_emb = jnp.sum(att * v_c, axis=1)
    q_repr = jax.nn.relu(q_c @ cast(p["wqn"]) + p["bqn"])
    v_repr = jax.nn.relu(cast(v_emb) @ cast(p["wvn"]) + p["bvn"])
    return q_repr * v_repr, att


if __name__ == "__main__":
    B, K = 2, 8
    V_DIM, Q_DIM, NUM_HID = 16, 32, 32    # q_dim == num_hid (required by self.linear)

    key = jax.random.PRNGKey(0)
    k_v, k_q, k_p = jax.random.split(key, 3)
    v_relation = jax.random.normal(k_v, (B, K, V_DIM), jnp.float32)
    q_emb = jax.random.normal(k_q, (B, Q_DIM), jnp.float32)
    params = init_params(k_p, V_DIM, Q_DIM, NUM_HID)

    # One-time param prep (bf16 MXU operands, f32 accumulation inside the kernel).
    prep = prepare_params(params, mxu_dtype=jnp.bfloat16)

    joint_emb, att = butd_forward(v_relation, q_emb, prep)
    joint_emb, att = jax.block_until_ready((joint_emb, att))

    ref_joint, ref_att = butd_reference(v_relation, q_emb, params, mxu_dtype=jnp.bfloat16)
    assert joint_emb.shape == (B, NUM_HID) and att.shape == (B, K, 1)
    # approx=True softmax reciprocal + one extra bf16 round of v_emb => ~1e-2 budget
    # against the bf16-quantized reference.
    assert jnp.allclose(att, ref_att, atol=2e-3, rtol=2e-3), \
        float(jnp.max(jnp.abs(att - ref_att)))
    assert jnp.allclose(joint_emb, ref_joint, atol=1e-2, rtol=1e-2), \
        float(jnp.max(jnp.abs(joint_emb - ref_joint)))

    print("KERNEL_OK")
</pallas_src>

<mosaic_0001>
module attributes {stable_mosaic.version = 11 : i64} {
  func.func @butd_kernel(%arg0: i32, %arg1: memref<2x8x16xbf16, #tpu.memory_space<vmem>>, %arg2: memref<2x32xbf16, #tpu.memory_space<vmem>>, %arg3: memref<16x32xbf16, #tpu.memory_space<vmem>>, %arg4: memref<1x32xf32, #tpu.memory_space<vmem>>, %arg5: memref<32x64xbf16, #tpu.memory_space<vmem>>, %arg6: memref<1x64xf32, #tpu.memory_space<vmem>>, %arg7: memref<1x32xf32, #tpu.memory_space<vmem>>, %arg8: memref<1x1xf32, #tpu.memory_space<smem>>, %arg9: memref<16x32xbf16, #tpu.memory_space<vmem>>, %arg10: memref<1x32xf32, #tpu.memory_space<vmem>>, %arg11: memref<2x32xf32, #tpu.memory_space<vmem>>, %arg12: memref<2x8xf32, #tpu.memory_space<vmem>>) attributes {dimension_semantics = [#tpu.dimension_semantics<parallel>], iteration_bounds = array<i64: 1>, scalar_prefetch = 0 : i64, scratch_operands = 0 : i64, tpu.core_type = #tpu.core_type<tc>, window_params = [{transform_indices = @transform_0, window_bounds = array<i64: 2, 8, 16>}, {transform_indices = @transform_1, window_bounds = array<i64: 2, 32>}, {pipeline_mode = #tpu.pipeline_mode<synchronous>, transform_indices = @transform_2, window_bounds = array<i64: 16, 32>}, {pipeline_mode = #tpu.pipeline_mode<synchronous>, transform_indices = @transform_3, window_bounds = array<i64: 1, 32>}, {pipeline_mode = #tpu.pipeline_mode<synchronous>, transform_indices = @transform_4, window_bounds = array<i64: 32, 64>}, {pipeline_mode = #tpu.pipeline_mode<synchronous>, transform_indices = @transform_5, window_bounds = array<i64: 1, 64>}, {pipeline_mode = #tpu.pipeline_mode<synchronous>, transform_indices = @transform_6, window_bounds = array<i64: 1, 32>}, {transform_indices = @transform_7, window_bounds = array<i64: 1, 1>}, {pipeline_mode = #tpu.pipeline_mode<synchronous>, transform_indices = @transform_8, window_bounds = array<i64: 16, 32>}, {pipeline_mode = #tpu.pipeline_mode<synchronous>, transform_indices = @transform_9, window_bounds = array<i64: 1, 32>}, {transform_indices = @transform_10, window_bounds = array<i64: 2, 32>}, {transform_indices = @transform_11, window_bounds = array<i64: 2, 8>}]} {
    %c0 = arith.constant 0 : index
    %c0_0 = arith.constant 0 : index
    %0 = memref.load %arg8[%c0, %c0_0] : memref<1x1xf32, #tpu.memory_space<smem>>
    %c0_1 = arith.constant 0 : index
    %c0_2 = arith.constant 0 : index
    %1 = vector.load %arg4[%c0_1, %c0_2] : memref<1x32xf32, #tpu.memory_space<vmem>>, vector<1x32xf32>
    %c0_3 = arith.constant 0 : index
    %c0_4 = arith.constant 0 : index
    %2 = vector.load %arg3[%c0_3, %c0_4] : memref<16x32xbf16, #tpu.memory_space<vmem>>, vector<16x32xbf16>
    %c0_5 = arith.constant 0 : index
    %c0_6 = arith.constant 0 : index
    %3 = vector.load %arg2[%c0_5, %c0_6] : memref<2x32xbf16, #tpu.memory_space<vmem>>, vector<2x32xbf16>
    %c0_7 = arith.constant 0 : index
    %c0_8 = arith.constant 0 : index
    %4 = vector.load %arg5[%c0_7, %c0_8] : memref<32x64xbf16, #tpu.memory_space<vmem>>, vector<32x64xbf16>
    %cst = arith.constant dense<0.000000e+00> : vector<2x64xf32>
    %5 = tpu.matmul %3, %4, %cst {dimension_numbers = #tpu.dot_dimension_numbers<[1], [0], [0], [1], [0, 0, 1, 1], [], []>} : vector<2x32xbf16>, vector<32x64xbf16>, vector<2x64xf32> -> vector<2x64xf32>
    %c0_9 = arith.constant 0 : index
    %c0_10 = arith.constant 0 : index
    %6 = vector.load %arg6[%c0_9, %c0_10] : memref<1x64xf32, #tpu.memory_space<vmem>>, vector<1x64xf32>
    %7 = vector.broadcast %6 : vector<1x64xf32> to vector<2x64xf32>
    %8 = arith.addf %5, %7 : vector<2x64xf32>
    %cst_11 = arith.constant 0.000000e+00 : f32
    %9 = vector.broadcast %cst_11 : f32 to vector<2x64xf32>
    %10 = arith.maximumf %8, %9 : vector<2x64xf32>
    %11 = vector.extract_strided_slice %10 {offsets = [0, 0], sizes = [2, 32], strides = [1, 1]} : vector<2x64xf32> to vector<2x32xf32>
    %12 = vector.extract_strided_slice %10 {offsets = [0, 32], sizes = [2, 32], strides = [1, 1]} : vector<2x64xf32> to vector<2x32xf32>
    %c0_12 = arith.constant 0 : index
    %c0_13 = arith.constant 0 : index
    %13 = vector.load %arg7[%c0_12, %c0_13] : memref<1x32xf32, #tpu.memory_space<vmem>>, vector<1x32xf32>
    %14 = vector.broadcast %13 : vector<1x32xf32> to vector<2x32xf32>
    %15 = arith.mulf %11, %14 : vector<2x32xf32>
    %16 = vector.shape_cast %15 : vector<2x32xf32> to vector<2x1x32xf32>
    %c0_14 = arith.constant 0 : index
    %c0_15 = arith.constant 0 : index
    %c0_16 = arith.constant 0 : index
    %17 = vector.load %arg1[%c0_14, %c0_15, %c0_16] : memref<2x8x16xbf16, #tpu.memory_space<vmem>>, vector<2x8x16xbf16>
    %18 = vector.shape_cast %17 : vector<2x8x16xbf16> to vector<16x16xbf16>
    %cst_17 = arith.constant dense<0.000000e+00> : vector<16x32xf32>
    %19 = tpu.matmul %18, %2, %cst_17 {dimension_numbers = #tpu.dot_dimension_numbers<[1], [0], [0], [1], [0, 0, 1, 1], [], []>} : vector<16x16xbf16>, vector<16x32xbf16>, vector<16x32xf32> -> vector<16x32xf32>
    %20 = vector.broadcast %1 : vector<1x32xf32> to vector<16x32xf32>
    %21 = arith.addf %19, %20 : vector<16x32xf32>
    %cst_18 = arith.constant 0.000000e+00 : f32
    %22 = vector.broadcast %cst_18 : f32 to vector<16x32xf32>
    %23 = arith.maximumf %21, %22 : vector<16x32xf32>
    %24 = vector.shape_cast %23 : vector<16x32xf32> to vector<2x8x32xf32>
    %25 = vector.broadcast %16 : vector<2x1x32xf32> to vector<2x8x32xf32>
    %26 = arith.mulf %24, %25 : vector<2x8x32xf32>
    %cst_19 = arith.constant dense<0.000000e+00> : vector<2x8xf32>
    %27 = vector.multi_reduction <add>, %26, %cst_19 [2] : vector<2x8x32xf32> to vector<2x8xf32>
    %28 = vector.broadcast %0 : f32 to vector<2x8xf32>
    %29 = arith.addf %27, %28 : vector<2x8xf32>
    %cst_20 = arith.constant 0.000000e+00 : f32
    %30 = vector.broadcast %cst_20 : f32 to vector<2x8xf32>
    %31 = arith.maximumf %29, %30 : vector<2x8xf32>
    %cst_21 = arith.constant dense<0xFF800000> : vector<2xf32>
    %32 = vector.multi_reduction <maximumf>, %31, %cst_21 [1] : vector<2x8xf32> to vector<2xf32>
    %33 = vector.shape_cast %32 : vector<2xf32> to vector<2x1xf32>
    %34 = vector.broadcast %33 : vector<2x1xf32> to vector<2x8xf32>
    %35 = arith.subf %31, %34 : vector<2x8xf32>
    %36 = math.exp %35 : vector<2x8xf32>
    %cst_22 = arith.constant dense<0.000000e+00> : vector<2xf32>
    %37 = vector.multi_reduction <add>, %36, %cst_22 [1] : vector<2x8xf32> to vector<2xf32>
    %38 = vector.shape_cast %37 : vector<2xf32> to vector<2x1xf32>
    %39 = tpu.reciprocal %38 {approx = true} : vector<2x1xf32> -> vector<2x1xf32>
    %40 = vector.broadcast %39 : vector<2x1xf32> to vector<2x8xf32>
    %41 = arith.mulf %36, %40 : vector<2x8xf32>
    %c0_23 = arith.constant 0 : index
    %c0_24 = arith.constant 0 : index
    %42 = vector.load %arg12[%c0_23, %c0_24] : memref<2x8xf32, #tpu.memory_space<vmem>>, vector<2x8xf32>
    tpu.vector_store %arg12[%c0_23, %c0_24], %41 {strides = array<i32>} : memref<2x8xf32, #tpu.memory_space<vmem>>, vector<2x8xf32>,
    %cst_25 = arith.constant 0.000000e+00 : f32
    %43 = vector.broadcast %cst_25 : f32 to vector<2x16xf32>
    %44 = vector.shape_cast %41 : vector<2x8xf32> to vector<2x8x1xf32>
    %c0_26 = arith.constant 0 : index
    %c0_27 = arith.constant 0 : index
    %c0_28 = arith.constant 0 : index
    %45 = vector.load %arg1[%c0_26, %c0_27, %c0_28] : memref<2x8x16xbf16, #tpu.memory_space<vmem>>, vector<2x8x16xbf16>
    %46 = arith.extf %45 : vector<2x8x16xbf16> to vector<2x8x16xf32>
    %47 = vector.broadcast %44 : vector<2x8x1xf32> to vector<2x8x16xf32>
    %48 = arith.mulf %47, %46 : vector<2x8x16xf32>
    %cst_29 = arith.constant dense<0.000000e+00> : vector<2x16xf32>
    %49 = vector.multi_reduction <add>, %48, %cst_29 [1] : vector<2x8x16xf32> to vector<2x16xf32>
    %50 = arith.addf %43, %49 : vector<2x16xf32>
    %51 = arith.truncf %50 : vector<2x16xf32> to vector<2x16xbf16>
    %c0_30 = arith.constant 0 : index
    %c0_31 = arith.constant 0 : index
    %52 = vector.load %arg9[%c0_30, %c0_31] : memref<16x32xbf16, #tpu.memory_space<vmem>>, vector<16x32xbf16>
    %cst_32 = arith.constant dense<0.000000e+00> : vector<2x32xf32>
    %53 = tpu.matmul %51, %52, %cst_32 {dimension_numbers = #tpu.dot_dimension_numbers<[1], [0], [0], [1], [0, 0, 1, 1], [], []>} : vector<2x16xbf16>, vector<16x32xbf16>, vector<2x32xf32> -> vector<2x32xf32>
    %c0_33 = arith.constant 0 : index
    %c0_34 = arith.constant 0 : index
    %54 = vector.load %arg10[%c0_33, %c0_34] : memref<1x32xf32, #tpu.memory_space<vmem>>, vector<1x32xf32>
    %55 = vector.broadcast %54 : vector<1x32xf32> to vector<2x32xf32>
    %56 = arith.addf %53, %55 : vector<2x32xf32>
    %cst_35 = arith.constant 0.000000e+00 : f32
    %57 = vector.broadcast %cst_35 : f32 to vector<2x32xf32>
    %58 = arith.maximumf %56, %57 : vector<2x32xf32>
    %59 = arith.mulf %12, %58 : vector<2x32xf32>
    %c0_36 = arith.constant 0 : index
    %c0_37 = arith.constant 0 : index
    %60 = vector.load %arg11[%c0_36, %c0_37] : memref<2x32xf32, #tpu.memory_space<vmem>>, vector<2x32xf32>
    tpu.vector_store %arg11[%c0_36, %c0_37], %59 {strides = array<i32>} : memref<2x32xf32, #tpu.memory_space<vmem>>, vector<2x32xf32>,
    return
  }
  func.func @transform_0(%arg0: i32) -> (i32, i32, i32) {
    %c0_i32 = arith.constant 0 : i32
    %c0_i32_0 = arith.constant 0 : i32
    %c0_i32_1 = arith.constant 0 : i32
    return %arg0, %c0_i32, %c0_i32_0 : i32, i32, i32
  }
  func.func @transform_1(%arg0: i32) -> (i32, i32) {
    %c0_i32 = arith.constant 0 : i32
    %c0_i32_0 = arith.constant 0 : i32
    return %arg0, %c0_i32 : i32, i32
  }
  func.func @transform_2(%arg0: i32) -> (i32, i32) {
    %c0_i32 = arith.constant 0 : i32
    %c0_i32_0 = arith.constant 0 : i32
    %c0_i32_1 = arith.constant 0 : i32
    return %c0_i32, %c0_i32_0 : i32, i32
  }
  func.func @transform_3(%arg0: i32) -> (i32, i32) {
    %c0_i32 = arith.constant 0 : i32
    %c0_i32_0 = arith.constant 0 : i32
    %c0_i32_1 = arith.constant 0 : i32
    return %c0_i32, %c0_i32_0 : i32, i32
  }
  func.func @transform_4(%arg0: i32) -> (i32, i32) {
    %c0_i32 = arith.constant 0 : i32
    %c0_i32_0 = arith.constant 0 : i32
    %c0_i32_1 = arith.constant 0 : i32
    return %c0_i32, %c0_i32_0 : i32, i32
  }
  func.func @transform_5(%arg0: i32) -> (i32, i32) {
    %c0_i32 = arith.constant 0 : i32
    %c0_i32_0 = arith.constant 0 : i32
    %c0_i32_1 = arith.constant 0 : i32
    return %c0_i32, %c0_i32_0 : i32, i32
  }
  func.func @transform_6(%arg0: i32) -> (i32, i32) {
    %c0_i32 = arith.constant 0 : i32
    %c0_i32_0 = arith.constant 0 : i32
    %c0_i32_1 = arith.constant 0 : i32
    return %c0_i32, %c0_i32_0 : i32, i32
  }
  func.func @transform_7(%arg0: i32) -> (i32, i32) {
    %c0_i32 = arith.constant 0 : i32
    %c0_i32_0 = arith.constant 0 : i32
    %c0_i32_1 = arith.constant 0 : i32
    return %c0_i32, %c0_i32_0 : i32, i32
  }
  func.func @transform_8(%arg0: i32) -> (i32, i32) {
    %c0_i32 = arith.constant 0 : i32
    %c0_i32_0 = arith.constant 0 : i32
    %c0_i32_1 = arith.constant 0 : i32
    return %c0_i32, %c0_i32_0 : i32, i32
  }
  func.func @transform_9(%arg0: i32) -> (i32, i32) {
    %c0_i32 = arith.constant 0 : i32
    %c0_i32_0 = arith.constant 0 : i32
    %c0_i32_1 = arith.constant 0 : i32
    return %c0_i32, %c0_i32_0 : i32, i32
  }
  func.func @transform_10(%arg0: i32) -> (i32, i32) {
    %c0_i32 = arith.constant 0 : i32
    %c0_i32_0 = arith.constant 0 : i32
    return %arg0, %c0_i32 : i32, i32
  }
  func.func @transform_11(%arg0: i32) -> (i32, i32) {
    %c0_i32 = arith.constant 0 : i32
    %c0_i32_0 = arith.constant 0 : i32
    return %arg0, %c0_i32 : i32, i32
  }
}

</mosaic_0001>

<llo_original>
// kernel: tpu_custom_call.1
$region0: #{tpu_custom_call.1}
  #allocation0 [shape = 'u32[]', space=smem, size = 0x4, offset = 0x4, fixed_abs, tag = 'smem constant byte address 0x4 - core index']
  #allocation1 [shape = 'u32[72,128]{1,0:T(1,128)}', space=vmem, size = 0x9000, scoped, tag = 'internal scratch']
  #allocation2 [shape = 'f32[1,1]{1,0:T(1,128)S(6)}', space=smem, size = 0x200, scoped, tag = 'scoped memory for tpu_custom_call.1']
  %s0 = inlined_call_operand.hbm [shape: bf16[2,8,16], index: 0, kind: input, shape index: {}]
  %s1 = inlined_call_operand.hbm [shape: bf16[2,32], index: 1, kind: input, shape index: {}]
  %s2 = inlined_call_operand.hbm [shape: bf16[16,32], index: 2, kind: input, shape index: {}]
  %s3 = inlined_call_operand.hbm [shape: f32[1,32], index: 3, kind: input, shape index: {}]
  %s4 = inlined_call_operand.hbm [shape: bf16[32,64], index: 4, kind: input, shape index: {}]
  %s5 = inlined_call_operand.hbm [shape: f32[1,64], index: 5, kind: input, shape index: {}]
  %s6 = inlined_call_operand.hbm [shape: f32[1,32], index: 6, kind: input, shape index: {}]
  %s7 = inlined_call_operand.<no memory space> [shape: f32[1,1], index: 7, kind: input, shape index: {}]
  %s8 = inlined_call_operand.vmem [shape: bf16[16,32], index: 8, kind: input, shape index: {}]
  %s9 = inlined_call_operand.vmem [shape: f32[1,32], index: 9, kind: input, shape index: {}]
  %s10 = inlined_call_operand.hbm [shape: f32[2,32], index: 10, kind: output, shape index: {0}]
  %s11 = inlined_call_operand.hbm [shape: f32[2,8], index: 11, kind: output, shape index: {1}]
  %12 = xla_tuple %s10, %s11
  %s13 = sld [smem:[#allocation0]]
  $region86: #{tpu_custom_call.1} parent=0
    _
  %s15 = ssub.s32 1, %s13
  %s16 = scalar_select 0, %s15, %s13
  %17 = sst [smem:[#allocation2]] %s7
  $region1: #{tpu_custom_call.1} parent=0
    #allocation3 [shape = 'u8[4096]{0}', space=vmem, size = 0x1000, scoped, tag = 'input window, operand 0, single buffered']
    #allocation4 [shape = 's32[1]{0}', space=sflag, size = 0x4, scoped, tag = 'scoped memory for tpu_custom_call.1']
    #allocation5 [shape = 's32[1]{0}', space=sflag, size = 0x4, scoped, tag = 'scoped memory for tpu_custom_call.1']
    #allocation6 [shape = 'u8[512]{0}', space=vmem, size = 0x400, scoped, tag = 'input window, operand 1, single buffered']
    #allocation7 [shape = 's32[1]{0}', space=sflag, size = 0x4, scoped, tag = 'scoped memory for tpu_custom_call.1']
    #allocation8 [shape = 'u8[4096]{0}', space=vmem, size = 0x1000, scoped, tag = 'input window, operand 2, single buffered']
    #allocation9 [shape = 'u8[512]{0}', space=vmem, size = 0x400, scoped, tag = 'input window, operand 3, single buffered']
    #allocation10 [shape = 's32[1]{0}', space=sflag, size = 0x4, scoped, tag = 'scoped memory for tpu_custom_call.1']
    #allocation11 [shape = 'u8[8192]{0}', space=vmem, size = 0x2000, scoped, tag = 'input window, operand 4, single buffered']
    #allocation12 [shape = 'u8[512]{0}', space=vmem, size = 0x400, scoped, tag = 'input window, operand 5, single buffered']
    #allocation13 [shape = 's32[1]{0}', space=sflag, size = 0x4, scoped, tag = 'scoped memory for tpu_custom_call.1']
    #allocation14 [shape = 'u8[512]{0}', space=vmem, size = 0x400, scoped, tag = 'input window, operand 6, single buffered']
    #allocation15 [shape = 'u8[1024]{0}', space=vmem, size = 0x400, scoped, tag = 'output window, operand 0, single buffered']
    #allocation16 [shape = 'u8[1024]{0}', space=vmem, size = 0x400, scoped, tag = 'output window, operand 1, single buffered']
    #allocation17 [shape = 's32[1]{0}', space=sflag, size = 0x4, scoped, tag = 'scoped memory for tpu_custom_call.1']
    %18 = vsyncpa [#allocation4], 0
    %19 = vsyncpa [#allocation7], 0
    %20 = vsyncpa [#allocation10], 0
    %21 = vsyncpa [#allocation13], 0
    %22 = vsyncpa [#allocation5], 0
    %23 = vsyncpa [#allocation17], 0
    // Predicated region
    $region2: #{tpu_custom_call.1} parent=1 // pred_check
      _
    $region3: #{tpu_custom_call.1} parent=1 // pred_check_branch
      %25 = sbr.rel (0) target = $region5
    $region4: #{tpu_custom_call.1} parent=1 // pred_region
      %27 = vsyncadd [#allocation4], 0
      %s28 = sshll.u32 %s0, 4
      %s29 = int_to_ptr.hbm [resolvable:$true] %s28
      %s30 = sshll.u32 [#allocation3], 4
      %s31 = int_to_ptr.vmem [resolvable:$true] %s30
      %36 = dma.hbm_to_vmem [thread:$0]  %s29, 128, %s31, [#allocation4], 64, 64, 4
    $region5: #{tpu_custom_call.1} parent=1 // pred_fallthru
      _
    // Predicated region
    $region6: #{tpu_custom_call.1} parent=1 // pred_check
      _
    $region7: #{tpu_custom_call.1} parent=1 // pred_check_branch
      %38 = sbr.rel (0) target = $region9
    $region8: #{tpu_custom_call.1} parent=1 // pred_region
      %40 = vsyncadd [#allocation7], 0
      %s42 = sshll.u32 %s1, 4
      %s43 = int_to_ptr.hbm [resolvable:$true] %s42
      %s44 = sshll.u32 [#allocation6], 4
      %s45 = int_to_ptr.vmem [resolvable:$true] %s44
      %47 = dma.hbm_to_vmem [thread:$0]  %s43, 16, %s45, [#allocation7]
    $region9: #{tpu_custom_call.1} parent=1 // pred_fallthru
      _
    // Predicated region
    $region10: #{tpu_custom_call.1} parent=1 // pred_check
      _
    $region11: #{tpu_custom_call.1} parent=1 // pred_check_branch
      %49 = sbr.rel (0) target = $region13
    $region12: #{tpu_custom_call.1} parent=1 // pred_region
      %51 = vsyncadd [#allocation7], 0
      %s52 = sshll.u32 %s2, 4
      %s53 = int_to_ptr.hbm [resolvable:$true] %s52
      %s54 = sshll.u32 [#allocation8], 4
      %s55 = int_to_ptr.vmem [resolvable:$true] %s54
      %60 = dma.hbm_to_vmem [thread:$0]  %s53, 128, %s55, [#allocation7], 64, 64, 4
    $region13: #{tpu_custom_call.1} parent=1 // pred_fallthru
      _
    // Predicated region
    $region14: #{tpu_custom_call.1} parent=1 // pred_check
      _
    $region15: #{tpu_custom_call.1} parent=1 // pred_check_branch
      %62 = sbr.rel (0) target = $region17
    $region16: #{tpu_custom_call.1} parent=1 // pred_region
      %64 = vsyncadd [#allocation10], 0
      %s66 = sshll.u32 %s3, 4
      %s67 = int_to_ptr.hbm [resolvable:$true] %s66
      %s68 = sshll.u32 [#allocation9], 4
      %s69 = int_to_ptr.vmem [resolvable:$true] %s68
      %71 = dma.hbm_to_vmem [thread:$0]  %s67, 16, %s69, [#allocation10]
    $region17: #{tpu_custom_call.1} parent=1 // pred_fallthru
      _
    // Predicated region
    $region18: #{tpu_custom_call.1} parent=1 // pred_check
      _
    $region19: #{tpu_custom_call.1} parent=1 // pred_check_branch
      %73 = sbr.rel (0) target = $region21
    $region20: #{tpu_custom_call.1} parent=1 // pred_region
      %75 = vsyncadd [#allocation10], 0
      %s76 = sshll.u32 %s4, 4
      %s77 = int_to_ptr.hbm [resolvable:$true] %s76
      %s78 = sshll.u32 [#allocation11], 4
      %s79 = int_to_ptr.vmem [resolvable:$true] %s78
      %84 = dma.hbm_to_vmem [thread:$0]  %s77, 256, %s79, [#allocation10], 64, 64, 4
    $region21: #{tpu_custom_call.1} parent=1 // pred_fallthru
      _
    // Predicated region
    $region22: #{tpu_custom_call.1} parent=1 // pred_check
      _
    $region23: #{tpu_custom_call.1} parent=1 // pred_check_branch
      %86 = sbr.rel (0) target = $region25
    $region24: #{tpu_custom_call.1} parent=1 // pred_region
      %88 = vsyncadd [#allocation13], 0
      %s90 = sshll.u32 %s5, 4
      %s91 = int_to_ptr.hbm [resolvable:$true] %s90
      %s92 = sshll.u32 [#allocation12], 4
      %s93 = int_to_ptr.vmem [resolvable:$true] %s92
      %95 = dma.hbm_to_vmem [thread:$0]  %s91, 16, %s93, [#allocation13]
    $region25: #{tpu_custom_call.1} parent=1 // pred_fallthru
      _
    // Predicated region
    $region26: #{tpu_custom_call.1} parent=1 // pred_check
      _
    $region27: #{tpu_custom_call.1} parent=1 // pred_check_branch
      %97 = sbr.rel (0) target = $region29
    $region28: #{tpu_custom_call.1} parent=1 // pred_region
      %99 = vsyncadd [#allocation13], 0
      %s101 = sshll.u32 %s6, 4
      %s102 = int_to_ptr.hbm [resolvable:$true] %s101
      %s103 = sshll.u32 [#allocation14], 4
      %s104 = int_to_ptr.vmem [resolvable:$true] %s103
      %106 = dma.hbm_to_vmem [thread:$0]  %s102, 16, %s104, [#allocation13]
    $region29: #{tpu_custom_call.1} parent=1 // pred_fallthru
      _
    // Predicated region
    $region30: #{tpu_custom_call.1} parent=1 // pred_check
      _
    $region31: #{tpu_custom_call.1} parent=1 // pred_check_branch
      %108 = sbr.rel (0) target = $region33
    $region32: #{tpu_custom_call.1} parent=1 // pred_region
      _
    $region33: #{tpu_custom_call.1} parent=1 // pred_fallthru
      _
    // Predicated region
    $region34: #{tpu_custom_call.1} parent=1 // pred_check
      _
    $region35: #{tpu_custom_call.1} parent=1 // pred_check_branch
      %110 = sbr.rel (0) target = $region37
    $region36: #{tpu_custom_call.1} parent=1 // pred_region
      _
    $region37: #{tpu_custom_call.1} parent=1 // pred_fallthru
      _
    // Predicated region
    $region38: #{tpu_custom_call.1} parent=1 // pred_check
      _
    $region39: #{tpu_custom_call.1} parent=1 // pred_check_branch
      %112 = sbr.rel (0) target = $region41
    $region40: #{tpu_custom_call.1} parent=1 // pred_region
      _
    $region41: #{tpu_custom_call.1} parent=1 // pred_fallthru
      _
    // Predicated region
    $region42: #{tpu_custom_call.1} parent=1 // pred_check
      _
    $region43: #{tpu_custom_call.1} parent=1 // pred_check_branch
      %114 = sbr.rel (0) target = $region45
    $region44: #{tpu_custom_call.1} parent=1 // pred_region
      %116 = dma.done [#allocation4], 128
    $region45: #{tpu_custom_call.1} parent=1 // pred_fallthru
      _
    // Predicated region
    $region46: #{tpu_custom_call.1} parent=1 // pred_check
      _
    $region47: #{tpu_custom_call.1} parent=1 // pred_check_branch
      %118 = sbr.rel (0) target = $region49
    $region48: #{tpu_custom_call.1} parent=1 // pred_region
      %120 = dma.done [#allocation7], 16
    $region49: #{tpu_custom_call.1} parent=1 // pred_fallthru
      _
    // Predicated region
    $region50: #{tpu_custom_call.1} parent=1 // pred_check
      _
    $region51: #{tpu_custom_call.1} parent=1 // pred_check_branch
      %122 = sbr.rel (0) target = $region53
    $region52: #{tpu_custom_call.1} parent=1 // pred_region
      %124 = dma.done [#allocation7], 128
    $region53: #{tpu_custom_call.1} parent=1 // pred_fallthru
      _
    // Predicated region
    $region54: #{tpu_custom_call.1} parent=1 // pred_check
      _
    $region55: #{tpu_custom_call.1} parent=1 // pred_check_branch
      %126 = sbr.rel (0) target = $region57
    $region56: #{tpu_custom_call.1} parent=1 // pred_region
      %128 = dma.done [#allocation10], 16
    $region57: #{tpu_custom_call.1} parent=1 // pred_fallthru
      _
    // Predicated region
    $region58: #{tpu_custom_call.1} parent=1 // pred_check
      _
    $region59: #{tpu_custom_call.1} parent=1 // pred_check_branch
      %130 = sbr.rel (0) target = $region61
    $region60: #{tpu_custom_call.1} parent=1 // pred_region
      %132 = dma.done [#allocation10], 256
    $region61: #{tpu_custom_call.1} parent=1 // pred_fallthru
      _
    // Predicated region
    $region62: #{tpu_custom_call.1} parent=1 // pred_check
      _
    $region63: #{tpu_custom_call.1} parent=1 // pred_check_branch
      %134 = sbr.rel (0) target = $region65
    $region64: #{tpu_custom_call.1} parent=1 // pred_region
      %136 = dma.done [#allocation13], 16
    $region65: #{tpu_custom_call.1} parent=1 // pred_fallthru
      _
    // Predicated region
    $region66: #{tpu_custom_call.1} parent=1 // pred_check
      _
    $region67: #{tpu_custom_call.1} parent=1 // pred_check_branch
      %138 = sbr.rel (0) target = $region69
    $region68: #{tpu_custom_call.1} parent=1 // pred_region
      %140 = dma.done [#allocation13], 16
    $region69: #{tpu_custom_call.1} parent=1 // pred_fallthru
      _
    %s142 = sld [smem:[#allocation2]]
    %v143 = vld [vmem:[#allocation9] sm:$0x1]
    %v144 = vld [vmem:[#allocation8] sm:$0xf]
    %v145 = vld [vmem:[#allocation8 + $0x4] sm:$0xf]
    %v146 = vld [vmem:[#allocation6] sm:$0x1]
    %v147 = vld [vmem:[#allocation11] sm:$0xf]
    %v148 = vld [vmem:[#allocation11 + $0x4] sm:$0xf]
    %v149 = vld [vmem:[#allocation11 + $0x8] sm:$0xf]
    %v150 = vld [vmem:[#allocation11 + $0xc] sm:$0xf]
    %v151 = vld [vmem:[#allocation12] sm:$0x1]
    %v153 = vperm.slane %v151, 0
    %v159 = vunpack.c.l.b16 %v147
    %v160 = vunpack.c.l.b16 %v148
    %v161 = vunpack.c.l.b16 %v149
    %v162 = vunpack.c.l.b16 %v150
    %v163 = vpack.c.b16 %v160, %v159
    %v164 = vpack.c.b16 %v162, %v161
    %vm167 = vcmask 261120
    %v169 = vsel %vm167, %v146, 0
    %171 = vmatpush.bf16.msra.mxu0 0
    %172 = vmatpush.bf16.msra.mxu0 0
    %173 = vmatpush.bf16.msra.mxu0 0
    %174 = vmatpush.bf16.msra.mxu0 0
    %175 = vmatpush.bf16.msra.mxu0 0
    %176 = vmatpush.bf16.msra.mxu0 0
    %177 = vmatpush.bf16.msra.mxu0 %v164
    %178 = vmatpush.bf16.msra.mxu0 %v163
    %179 = vmatmul.bf16.gmra.mxu0 %v169
    %v180 = vpop.f32.mrf.mxu0
    %v181 = vadd.f32 %v153, %v180
    %v182 = vpop.f32.mrf.mxu0
    %183 = vdwg.mxu0
    %v184 = vmax.f32 %v181, 0.0
    %v185 = vld [vmem:[#allocation14] sm:$0x1]
    %v187 = vperm.slane %v185, 0
    %v189 = vmul.f32 %v184, %v187
    %v191 = vrot.slane %v189, 1
    %v192 = vld [vmem:[#allocation3] sm:$0xf]
    %v193 = vld [vmem:[#allocation3 + $0x4] sm:$0xf]
    %v195 = vperm.slane %v143, 0
    %v199 = vunpack.c.l.b16 %v192
    %v200 = vunpack.c.l.b16 %v193
    %v201 = vpack.c.b16 %v200, %v199
    %v204 = vunpack.c.l.b16 %v144
    %v205 = vunpack.c.l.b16 %v145
    %v206 = vpack.c.b16 %v205, %v204
    %vm208 = vcmask 130048
    %v210 = vsel %vm208, %v201, 0
    %212 = vmatpush.bf16.msra.mxu0 0
    %213 = vmatpush.bf16.msra.mxu0 0
    %214 = vmatpush.bf16.msra.mxu0 0
    %215 = vmatpush.bf16.msra.mxu0 0
    %216 = vmatpush.bf16.msra.mxu0 0
    %217 = vmatpush.bf16.msra.mxu0 0
    %218 = vmatpush.bf16.msra.mxu0 0
    %219 = vmatpush.bf16.msra.mxu0 %v206
    %220 = vmatmul.bf16.gmra.mxu0 %v210
    %v221 = vpop.f32.mrf.mxu0
    %v222 = vadd.f32 %v195, %v221
    %v223 = vpop.f32.mrf.mxu0
    %v224 = vadd.f32 %v195, %v223
    %225 = vdwg.mxu0
    %v226 = vmax.f32 %v222, 0.0
    %v227 = vmax.f32 %v224, 0.0
    %v228 = vperm.slane %v189, 0
    %v229 = vperm.slane %v191, 0
    %v232 = vmul.f32 %v226, %v228
    %v233 = vmul.f32 %v227, %v229
    %v234 = vsel %vm167, %v232, 0.0
    %235 = vadd.xlane.f32.xlu0 %v234
    %v236 = vpop.xlane.xlu0 %235
    %v237 = vsel %vm167, %v233, 0.0
    %238 = vadd.xlane.f32.xlu0 %v237
    %v239 = vpop.xlane.xlu0 %238
    %v240 = vstv %s142
    %v241 = vadd.f32 %v236, %v240
    %v242 = vadd.f32 %v239, %v240
    %v243 = vmax.f32 %v241, 0.0
    %v244 = vmax.f32 %v242, 0.0
    %v247 = vlaneseq
    %v248 = vand.u32 %v247, 127
    %v249 = vperm.slane %v243, %v248
    %v250 = vperm.slane %v244, %v248
    %vm251 = vcmask 1041409
    %v252 = vsel %vm251, %v250, %v249
    %vm254 = vcmask 58368
    %v255 = vsel %vm254, %v252, -inf
    %256 = vmax.xlane.f32.xlu0 %v255
    %v257 = vpop.xlane.xlu0 %256
    %v259 = vperm.slane %v257, 0
    %v260 = vperm.slane %v257, 1
    %v263 = vsub.f32 %v243, %v259
    %v264 = vsub.f32 %v244, %v260
    %v265 = vmul.f32 %v263, 1.442695
    %v266 = vpow.pop %v265
    %v267 = vmul.f32 %v264, 1.442695
    %v268 = vpow.pop %v267
    %271 = vset.pattern.permute.xlu0 0
    %272 = vperm.xlu0 %271, %v266
    %v273 = vpop.permute.xlu0 %272
    %274 = vset.pattern.permute.xlu0 0
    %275 = vperm.xlu0 %274, %v268
    %v276 = vpop.permute.xlu0 %275
    %v277 = vperm.slane %v273, %v248
    %v278 = vperm.slane %v276, %v248
    %v279 = vsel %vm251, %v278, %v277
    %v281 = vsel %vm254, %v279, 0.0
    %282 = vadd.xlane.f32.xlu0 %v281
    %v283 = vpop.xlane.xlu0 %282
    %v284 = vrcp.pop %v283
    %v286 = vperm.slane %v284, 0
    %v287 = vperm.slane %v284, 1
    %v290 = vmul.f32 %v266, %v286
    %v291 = vmul.f32 %v268, %v287
    %294 = vset.pattern.permute.xlu0 0
    %295 = vperm.xlu0 %294, %v290
    %v296 = vpop.permute.xlu0 %295
    %297 = vset.pattern.permute.xlu0 0
    %298 = vperm.xlu0 %297, %v291
    %v299 = vpop.permute.xlu0 %298
    %v300 = vperm.slane %v296, %v248
    %v301 = vperm.slane %v299, %v248
    %v302 = vsel %vm251, %v301, %v300
    %304 = vst.msk [vmem:[#allocation16] sm:$0x3] %vm254, %v302
    %v305 = vld [vmem:[#allocation3] sm:$0xf]
    %v306 = vld [vmem:[#allocation3 + $0x4] sm:$0xf]
    %v307 = vunpack.c.l.bf16 %v305
    %v308 = vunpack.c.l.bf16 %v306
    %v311 = vmul.f32 %v296, %v307
    %v312 = vmul.f32 %v299, %v308
    %v313 = vsel %vm208, %v311, 0.0
    %v314 = vrot.slane %v313, 4
    %v315 = vadd.f32 %v313, %v314
    %v316 = vrot.slane %v315, 2
    %v317 = vadd.f32 %v315, %v316
    %v318 = vrot.slane %v317, 1
    %v319 = vadd.f32 %v317, %v318
    %v320 = vsel %vm208, %v312, 0.0
    %v321 = vrot.slane %v320, 4
    %v322 = vadd.f32 %v320, %v321
    %v323 = vrot.slane %v322, 2
    %v324 = vadd.f32 %v322, %v323
    %v325 = vrot.slane %v324, 1
    %v326 = vadd.f32 %v324, %v325
    %v327 = vadd.f32 %v319, 0.0
    %v328 = vadd.f32 %v326, 0.0
    %v329 = vpack.c.bf16 %v327, %v327
    %v330 = vpack.c.bf16 %v328, %v328
    %v331 = vld [vmem:[%s8] sm:$0xf]
    %v332 = vld [vmem:[%s8 + $0x4] sm:$0xf]
    %v333 = vld [vmem:[%s9] sm:$0x1]
    %v335 = vperm.slane %v333, 0
    %v339 = vunpack.c.l.b16 %v329
    %v340 = vunpack.c.l.b16 %v330
    %v341 = vsel %vm251, %v340, %v339
    %v342 = vpack.c.b16 %v341, %v341
    %v345 = vunpack.c.l.b16 %v331
    %v346 = vunpack.c.l.b16 %v332
    %v347 = vpack.c.b16 %v346, %v345
    %v350 = vsel %vm208, %v342, 0
    %352 = vmatpush.bf16.msra.mxu0 0
    %353 = vmatpush.bf16.msra.mxu0 0
    %354 = vmatpush.bf16.msra.mxu0 0
    %355 = vmatpush.bf16.msra.mxu0 0
    %356 = vmatpush.bf16.msra.mxu0 0
    %357 = vmatpush.bf16.msra.mxu0 0
    %358 = vmatpush.bf16.msra.mxu0 0
    %359 = vmatpush.bf16.msra.mxu0 %v347
    %360 = vmatmul.bf16.gmra.mxu0 %v350
    %v361 = vpop.f32.mrf.mxu0
    %v362 = vadd.f32 %v335, %v361
    %v363 = vpop.f32.mrf.mxu0
    %364 = vdwg.mxu0
    %v365 = vmax.f32 %v362, 0.0
    %367 = vrot.lane.b32.xlu0 %v365, 32
    %v368 = vpop.permute.xlu0 %367
    %v370 = vmul.f32 %v184, %v368
    %372 = vrot.lane.b32.xlu0 %v370, 96
    %v373 = vpop.permute.xlu0 %372
    %vm375 = vcmask 254976
    %376 = vst.msk [vmem:[#allocation15] sm:$0x3] %vm375, %v373
    // Predicated region
    $region70: #{tpu_custom_call.1} parent=1 // pred_check
      _
    $region71: #{tpu_custom_call.1} parent=1 // pred_check_branch
      %378 = sbr.rel (0) target = $region73
    $region72: #{tpu_custom_call.1} parent=1 // pred_region
      %380 = vsyncadd [#allocation5], 0
      %s382 = sshll.u32 [#allocation15], 4
      %s383 = int_to_ptr.vmem [resolvable:$true] %s382
      %s384 = sshll.u32 %s10, 4
      %s385 = int_to_ptr.hbm [resolvable:$true] %s384
      %387 = dma.vmem_to_hbm [thread:$0]  %s383, 32, %s385, [#allocation5]
    $region73: #{tpu_custom_call.1} parent=1 // pred_fallthru
      _
    // Predicated region
    $region74: #{tpu_custom_call.1} parent=1 // pred_check
      _
    $region75: #{tpu_custom_call.1} parent=1 // pred_check_branch
      %389 = sbr.rel (0) target = $region77
    $region76: #{tpu_custom_call.1} parent=1 // pred_region
      %391 = vsyncadd [#allocation17], 0
      %s393 = sshll.u32 [#allocation16], 4
      %s394 = int_to_ptr.vmem [resolvable:$true] %s393
      %s395 = sshll.u32 %s11, 4
      %s396 = int_to_ptr.hbm [resolvable:$true] %s395
      %398 = dma.vmem_to_hbm [thread:$0]  %s394, 32, %s396, [#allocation17]
    $region77: #{tpu_custom_call.1} parent=1 // pred_fallthru
      _
    // Predicated region
    $region78: #{tpu_custom_call.1} parent=1 // pred_check
      _
    $region79: #{tpu_custom_call.1} parent=1 // pred_check_branch
      %400 = sbr.rel (0) target = $region81
    $region80: #{tpu_custom_call.1} parent=1 // pred_region
      %402 = dma.done [#allocation5], 32
    $region81: #{tpu_custom_call.1} parent=1 // pred_fallthru
      _
    // Predicated region
    $region82: #{tpu_custom_call.1} parent=1 // pred_check
      _
    $region83: #{tpu_custom_call.1} parent=1 // pred_check_branch
      %404 = sbr.rel (0) target = $region85
    $region84: #{tpu_custom_call.1} parent=1 // pred_region
      %406 = dma.done [#allocation17], 32
    $region85: #{tpu_custom_call.1} parent=1 // pred_fallthru
      _
    %407 = vsyncpa [#allocation4], 1
    %408 = vsyncpa [#allocation7], 1
    %409 = vsyncpa [#allocation10], 1
    %410 = vsyncpa [#allocation13], 1
    %411 = vsyncpa [#allocation5], 1
    %412 = vsyncpa [#allocation17], 1

</llo_original>
